<compile_context>
chip_gen: v5e
topology: v5e:2x2
jax: 0.10.0
libtpu: 0.0.40
codegen_flags: <defaults>
</compile_context>

<pallas_src>
import functools

import jax
import jax.numpy as jnp
import numpy as np
from jax import lax
from jax.experimental import pallas as pl
from jax.experimental.pallas import tpu as pltpu


# --------------------------------------------------------------------------------------
# Kernels
# --------------------------------------------------------------------------------------
def _brn_train_kernel(x_ref, rm_ref, rv_ref, w_ref, b_ref,
                      y_ref, new_rm_ref, new_rv_ref, rd_ref,
                      *, eps, momentum, rmax, dmax):
    xf = x_ref[...].astype(jnp.float32)                     # (N, TC)
    n = xf.shape[0]

    # One-pass per-channel statistics: sum and sum of squares.
    s = jnp.sum(xf, axis=0, keepdims=True)                  # (1, TC)
    ss = jnp.sum(xf * xf, axis=0, keepdims=True)            # (1, TC)
    mean = s * (1.0 / n)
    sq_sum = jnp.maximum(ss - s * mean, 0.0)                # sum((x - mean)^2), >= 0
    invstd = lax.rsqrt(sq_sum * (1.0 / n) + eps)            # biased invstd (EUP)
    unbiased_var = sq_sum * (1.0 / (n - 1))

    rm = rm_ref[...].astype(jnp.float32)                    # running_mean (1, TC)
    rv = rv_ref[...].astype(jnp.float32)                    # running_var  (1, TC)
    inv_rv_sqrt = lax.rsqrt(rv)                             # matches torch: no eps here

    r = jnp.clip(jnp.sqrt(unbiased_var) * inv_rv_sqrt, 1.0 / rmax, rmax)
    d = jnp.clip((mean - rm) * inv_rv_sqrt, -dmax, dmax)

    # Fold normalize + renorm + affine into one per-channel scale/shift:
    #   y = ((x - mean) * invstd * r + d) * w + b = x * scale + shift
    w = w_ref[...].astype(jnp.float32)
    b = b_ref[...].astype(jnp.float32)
    a = invstd * r
    scale = w * a
    shift = w * (d - mean * a) + b

    # Running-statistic update (same semantics as the in-place += in PyTorch).
    new_rm_ref[...] = (rm + momentum * (mean - rm)).astype(new_rm_ref.dtype)
    new_rv_ref[...] = (rv + momentum * (unbiased_var - rv)).astype(new_rv_ref.dtype)
    rd_ref[0:1, :] = r.astype(rd_ref.dtype)
    rd_ref[1:2, :] = d.astype(rd_ref.dtype)

    # Single fused multiply-add over the big tile.  For narrow inputs (bf16) compute
    # the FMA in the input dtype (bf16 VALU on v6e/v7x); f32 inputs stay in f32.
    if x_ref.dtype == jnp.float32:
        y = xf * scale + shift
    else:
        y = x_ref[...] * scale.astype(x_ref.dtype) + shift.astype(x_ref.dtype)
    y_ref[...] = y.astype(y_ref.dtype)


def _brn_eval_kernel(x_ref, rm_ref, rv_ref, w_ref, b_ref, y_ref, *, eps):
    rm = rm_ref[...].astype(jnp.float32)
    rv = rv_ref[...].astype(jnp.float32)
    w = w_ref[...].astype(jnp.float32)
    b = b_ref[...].astype(jnp.float32)
    scale = w * lax.rsqrt(rv + eps)
    shift = b - rm * scale
    if x_ref.dtype == jnp.float32:
        y = x_ref[...] * scale + shift
    else:
        y = x_ref[...] * scale.astype(x_ref.dtype) + shift.astype(x_ref.dtype)
    y_ref[...] = y.astype(y_ref.dtype)


# --------------------------------------------------------------------------------------
# Tiling helpers
# --------------------------------------------------------------------------------------
def _choose_channel_tiling(n_rows, c, itemsize):
    """Pick a lane-aligned channel tile TC and the padded channel count Cp."""
    budget = 24 * 1024 * 1024            # double-buffered x-in + y-out tile budget
    per_col = 4 * n_rows * max(itemsize, 4)   # 2 bufs x + 2 bufs y, f32 worst case
    cols = max(128, budget // per_col)
    tc = max(128, min((cols // 128) * 128, 2048))
    c_padded = ((c + 127) // 128) * 128
    tc = min(tc, c_padded)
    c_padded = ((c_padded + tc - 1) // tc) * tc   # make Cp a multiple of TC
    return tc, c_padded


def _vmem_limit_bytes(n_rows, tc, itemsize):
    big = 4 * n_rows * tc * max(itemsize, 4)      # double-buffered x + y tiles
    small = 2 * 8 * 8 * tc * 4                    # small per-channel rows, padded
    est = big + small + (2 << 20)
    return int(min(max(est, 32 * 1024 * 1024), 56 * 1024 * 1024))


def _pad_cols(a, c, c_padded, value=0.0):
    if c_padded == c:
        return a
    return jnp.pad(a, ((0, 0), (0, c_padded - c)), constant_values=value)


# --------------------------------------------------------------------------------------
# Wrappers
# --------------------------------------------------------------------------------------
def batch_renorm1d_train(x, running_mean, running_var, weight, bias,
                         eps=1e-5, momentum=0.1, rmax=3.0, dmax=5.0):
    """Training-mode BatchReNorm1d forward.

    x: (N, C); per-feature params/buffers: (C,).
    Returns (y, new_running_mean, new_running_var, r, d).
    """
    N, C = x.shape
    assert N >= 2, "Batch ReNorm training needs N >= 2 (unbiased variance)."

    itemsize = jnp.dtype(x.dtype).itemsize
    tc, Cp = _choose_channel_tiling(N, C, itemsize)

    xp = _pad_cols(x, C, Cp)
    rm = _pad_cols(running_mean.reshape(1, C).astype(jnp.float32), C, Cp)
    # pad running_var with 1.0 so rsqrt() on padded channels stays finite
    rv = _pad_cols(running_var.reshape(1, C).astype(jnp.float32), C, Cp, value=1.0)
    w = _pad_cols(weight.reshape(1, C).astype(jnp.float32), C, Cp)
    b = _pad_cols(bias.reshape(1, C).astype(jnp.float32), C, Cp)

    kernel = functools.partial(_brn_train_kernel, eps=eps, momentum=momentum,
                               rmax=rmax, dmax=dmax)

    x_spec = pl.BlockSpec((N, tc), lambda j: (0, j))
    v_spec = pl.BlockSpec((1, tc), lambda j: (0, j))
    rd_spec = pl.BlockSpec((2, tc), lambda j: (0, j))

    y, new_rm, new_rv, rd = pl.pallas_call(
        kernel,
        out_shape=(
            jax.ShapeDtypeStruct((N, Cp), x.dtype),
            jax.ShapeDtypeStruct((1, Cp), jnp.float32),
            jax.ShapeDtypeStruct((1, Cp), jnp.float32),
            jax.ShapeDtypeStruct((2, Cp), jnp.float32),
        ),
        grid=(Cp // tc,),
        in_specs=[x_spec, v_spec, v_spec, v_spec, v_spec],
        out_specs=(x_spec, v_spec, v_spec, rd_spec),
        # Donate the running-stat buffers to the updated outputs (in-place += semantics).
        input_output_aliases={1: 1, 2: 2},
        compiler_params=pltpu.CompilerParams(
            dimension_semantics=("parallel",),
            vmem_limit_bytes=_vmem_limit_bytes(N, tc, itemsize)),
    )(xp, rm, rv, w, b)

    return (y[:, :C], new_rm[0, :C], new_rv[0, :C], rd[0, :C], rd[1, :C])


def batch_renorm1d_eval(x, running_mean, running_var, weight, bias, eps=1e-5):
    N, C = x.shape
    itemsize = jnp.dtype(x.dtype).itemsize
    tc, Cp = _choose_channel_tiling(N, C, itemsize)

    xp = _pad_cols(x, C, Cp)
    rm = _pad_cols(running_mean.reshape(1, C).astype(jnp.float32), C, Cp)
    rv = _pad_cols(running_var.reshape(1, C).astype(jnp.float32), C, Cp, value=1.0)
    w = _pad_cols(weight.reshape(1, C).astype(jnp.float32), C, Cp)
    b = _pad_cols(bias.reshape(1, C).astype(jnp.float32), C, Cp)

    kernel = functools.partial(_brn_eval_kernel, eps=eps)
    x_spec = pl.BlockSpec((N, tc), lambda j: (0, j))
    v_spec = pl.BlockSpec((1, tc), lambda j: (0, j))

    y = pl.pallas_call(
        kernel,
        out_shape=jax.ShapeDtypeStruct((N, Cp), x.dtype),
        grid=(Cp // tc,),
        in_specs=[x_spec, v_spec, v_spec, v_spec, v_spec],
        out_specs=x_spec,
        compiler_params=pltpu.CompilerParams(
            dimension_semantics=("parallel",),
            vmem_limit_bytes=_vmem_limit_bytes(N, tc, itemsize)),
    )(xp, rm, rv, w, b)
    return y[:, :C]


# --------------------------------------------------------------------------------------
# Pure-JAX reference (mirrors the PyTorch forward exactly) for a correctness check.
# --------------------------------------------------------------------------------------
def _ref_train(x, rm, rv, w, b, eps, momentum, rmax, dmax):
    n = x.shape[0]
    mean = jnp.mean(x, axis=0)
    sq = jnp.sum((x - mean[None, :]) ** 2, axis=0)
    invstd = 1.0 / jnp.sqrt(sq / n + eps)
    uvar = sq / (n - 1)
    r = jnp.clip(jnp.sqrt(uvar) / jnp.sqrt(rv), 1.0 / rmax, rmax)
    d = jnp.clip((mean - rm) / jnp.sqrt(rv), -dmax, dmax)
    xn = (x - mean[None, :]) * invstd[None, :]
    xn = xn * r[None, :] + d[None, :]
    new_rm = rm + momentum * (mean - rm)
    new_rv = rv + momentum * (uvar - rv)
    y = xn * w[None, :] + b[None, :]
    return y, new_rm, new_rv, r, d


def _ref_eval(x, rm, rv, w, b, eps):
    invstd = 1.0 / jnp.sqrt(rv + eps)
    return (x - rm[None, :]) * invstd[None, :] * w[None, :] + b[None, :]


if __name__ == "__main__":
    num_features = 32   # C (deliberately non-128-aligned; wrapper pads the lanes)
    batch = 8           # N

    key = jax.random.PRNGKey(0)
    kx, kw = jax.random.split(key)

    # Deterministic parameter / buffer init matching reset_parameters():
    #   running_mean = 0, running_var = 1, weight ~ U[0,1), bias = 0.
    x = jax.random.normal(kx, (batch, num_features), dtype=jnp.float32)
    weight = jax.random.uniform(kw, (num_features,), dtype=jnp.float32)
    bias = jnp.zeros((num_features,), dtype=jnp.float32)
    running_mean = jnp.zeros((num_features,), dtype=jnp.float32)
    running_var = jnp.ones((num_features,), dtype=jnp.float32)

    eps, momentum, rmax, dmax = 1e-5, 0.1, 3.0, 5.0

    # Reference computed up front (the kernel donates the running-stat buffers).
    ref = _ref_train(x, running_mean, running_var, weight, bias,
                     eps, momentum, rmax, dmax)

    # Training-mode forward (the interesting path).
    y, new_rm, new_rv, r, d = batch_renorm1d_train(
        x, running_mean, running_var, weight, bias,
        eps=eps, momentum=momentum, rmax=rmax, dmax=dmax)
    jax.block_until_ready((y, new_rm, new_rv, r, d))

    for got, want in zip((y, new_rm, new_rv, r, d), ref):
        np.testing.assert_allclose(np.asarray(got), np.asarray(want),
                                   rtol=1e-5, atol=1e-5)

    # Eval-mode forward (uses the updated running stats).
    y_eval = batch_renorm1d_eval(x, new_rm, new_rv, weight, bias, eps=eps)
    jax.block_until_ready(y_eval)
    np.testing.assert_allclose(
        np.asarray(y_eval),
        np.asarray(_ref_eval(x, new_rm, new_rv, weight, bias, eps)),
        rtol=1e-5, atol=1e-5)

    print("KERNEL_OK")
</pallas_src>

<mosaic_0001>
module attributes {stable_mosaic.version = 11 : i64} {
  func.func @_brn_train_kernel(%arg0: i32, %arg1: memref<8x128xf32, #tpu.memory_space<vmem>>, %arg2: memref<1x128xf32, #tpu.memory_space<vmem>>, %arg3: memref<1x128xf32, #tpu.memory_space<vmem>>, %arg4: memref<1x128xf32, #tpu.memory_space<vmem>>, %arg5: memref<1x128xf32, #tpu.memory_space<vmem>>, %arg6: memref<8x128xf32, #tpu.memory_space<vmem>>, %arg7: memref<1x128xf32, #tpu.memory_space<vmem>>, %arg8: memref<1x128xf32, #tpu.memory_space<vmem>>, %arg9: memref<2x128xf32, #tpu.memory_space<vmem>>) attributes {dimension_semantics = [#tpu.dimension_semantics<parallel>], iteration_bounds = array<i64: 1>, scalar_prefetch = 0 : i64, scratch_operands = 0 : i64, tpu.core_type = #tpu.core_type<tc>, window_params = [{transform_indices = @transform_0, window_bounds = array<i64: 8, 128>}, {transform_indices = @transform_1, window_bounds = array<i64: 1, 128>}, {transform_indices = @transform_2, window_bounds = array<i64: 1, 128>}, {transform_indices = @transform_3, window_bounds = array<i64: 1, 128>}, {transform_indices = @transform_4, window_bounds = array<i64: 1, 128>}, {transform_indices = @transform_5, window_bounds = array<i64: 8, 128>}, {transform_indices = @transform_6, window_bounds = array<i64: 1, 128>}, {transform_indices = @transform_7, window_bounds = array<i64: 1, 128>}, {transform_indices = @transform_8, window_bounds = array<i64: 2, 128>}]} {
    %c0 = arith.constant 0 : index
    %c0_0 = arith.constant 0 : index
    %0 = vector.load %arg1[%c0, %c0_0] : memref<8x128xf32, #tpu.memory_space<vmem>>, vector<8x128xf32>
    %cst = arith.constant dense<0.000000e+00> : vector<128xf32>
    %1 = vector.multi_reduction <add>, %0, %cst [0] : vector<8x128xf32> to vector<128xf32>
    %2 = vector.shape_cast %1 : vector<128xf32> to vector<1x128xf32>
    %3 = arith.mulf %0, %0 : vector<8x128xf32>
    %cst_1 = arith.constant dense<0.000000e+00> : vector<128xf32>
    %4 = vector.multi_reduction <add>, %3, %cst_1 [0] : vector<8x128xf32> to vector<128xf32>
    %5 = vector.shape_cast %4 : vector<128xf32> to vector<1x128xf32>
    %cst_2 = arith.constant 1.250000e-01 : f32
    %6 = vector.broadcast %cst_2 : f32 to vector<1x128xf32>
    %7 = arith.mulf %2, %6 : vector<1x128xf32>
    %8 = arith.mulf %2, %7 : vector<1x128xf32>
    %9 = arith.subf %5, %8 : vector<1x128xf32>
    %cst_3 = arith.constant 0.000000e+00 : f32
    %10 = vector.broadcast %cst_3 : f32 to vector<1x128xf32>
    %11 = arith.maximumf %9, %10 : vector<1x128xf32>
    %cst_4 = arith.constant 1.250000e-01 : f32
    %12 = vector.broadcast %cst_4 : f32 to vector<1x128xf32>
    %13 = arith.mulf %11, %12 : vector<1x128xf32>
    %cst_5 = arith.constant 9.99999974E-6 : f32
    %14 = vector.broadcast %cst_5 : f32 to vector<1x128xf32>
    %15 = arith.addf %13, %14 : vector<1x128xf32>
    %16 = math.rsqrt %15 : vector<1x128xf32>
    %cst_6 = arith.constant 0.142857149 : f32
    %17 = vector.broadcast %cst_6 : f32 to vector<1x128xf32>
    %18 = arith.mulf %11, %17 : vector<1x128xf32>
    %c0_7 = arith.constant 0 : index
    %c0_8 = arith.constant 0 : index
    %19 = vector.load %arg2[%c0_7, %c0_8] : memref<1x128xf32, #tpu.memory_space<vmem>>, vector<1x128xf32>
    %c0_9 = arith.constant 0 : index
    %c0_10 = arith.constant 0 : index
    %20 = vector.load %arg3[%c0_9, %c0_10] : memref<1x128xf32, #tpu.memory_space<vmem>>, vector<1x128xf32>
    %21 = math.rsqrt %20 : vector<1x128xf32>
    %22 = math.sqrt %18 : vector<1x128xf32>
    %23 = arith.mulf %22, %21 : vector<1x128xf32>
    %cst_11 = arith.constant 0.333333343 : f32
    %cst_12 = arith.constant 3.000000e+00 : f32
    %24 = vector.broadcast %cst_11 : f32 to vector<1x128xf32>
    %25 = arith.maximumf %24, %23 : vector<1x128xf32>
    %26 = vector.broadcast %cst_12 : f32 to vector<1x128xf32>
    %27 = arith.minimumf %26, %25 : vector<1x128xf32>
    %28 = arith.subf %7, %19 : vector<1x128xf32>
    %29 = arith.mulf %28, %21 : vector<1x128xf32>
    %cst_13 = arith.constant -5.000000e+00 : f32
    %cst_14 = arith.constant 5.000000e+00 : f32
    %30 = vector.broadcast %cst_13 : f32 to vector<1x128xf32>
    %31 = arith.maximumf %30, %29 : vector<1x128xf32>
    %32 = vector.broadcast %cst_14 : f32 to vector<1x128xf32>
    %33 = arith.minimumf %32, %31 : vector<1x128xf32>
    %c0_15 = arith.constant 0 : index
    %c0_16 = arith.constant 0 : index
    %34 = vector.load %arg4[%c0_15, %c0_16] : memref<1x128xf32, #tpu.memory_space<vmem>>, vector<1x128xf32>
    %c0_17 = arith.constant 0 : index
    %c0_18 = arith.constant 0 : index
    %35 = vector.load %arg5[%c0_17, %c0_18] : memref<1x128xf32, #tpu.memory_space<vmem>>, vector<1x128xf32>
    %36 = arith.mulf %16, %27 : vector<1x128xf32>
    %37 = arith.mulf %34, %36 : vector<1x128xf32>
    %38 = arith.mulf %7, %36 : vector<1x128xf32>
    %39 = arith.subf %33, %38 : vector<1x128xf32>
    %40 = arith.mulf %34, %39 : vector<1x128xf32>
    %41 = arith.addf %40, %35 : vector<1x128xf32>
    %42 = arith.subf %7, %19 : vector<1x128xf32>
    %cst_19 = arith.constant 1.000000e-01 : f32
    %43 = vector.broadcast %cst_19 : f32 to vector<1x128xf32>
    %44 = arith.mulf %43, %42 : vector<1x128xf32>
    %45 = arith.addf %19, %44 : vector<1x128xf32>
    %c0_20 = arith.constant 0 : index
    %c0_21 = arith.constant 0 : index
    %46 = vector.load %arg7[%c0_20, %c0_21] : memref<1x128xf32, #tpu.memory_space<vmem>>, vector<1x128xf32>
    tpu.vector_store %arg7[%c0_20, %c0_21], %45 {strides = array<i32>} : memref<1x128xf32, #tpu.memory_space<vmem>>, vector<1x128xf32>,
    %47 = arith.subf %18, %20 : vector<1x128xf32>
    %cst_22 = arith.constant 1.000000e-01 : f32
    %48 = vector.broadcast %cst_22 : f32 to vector<1x128xf32>
    %49 = arith.mulf %48, %47 : vector<1x128xf32>
    %50 = arith.addf %20, %49 : vector<1x128xf32>
    %c0_23 = arith.constant 0 : index
    %c0_24 = arith.constant 0 : index
    %51 = vector.load %arg8[%c0_23, %c0_24] : memref<1x128xf32, #tpu.memory_space<vmem>>, vector<1x128xf32>
    tpu.vector_store %arg8[%c0_23, %c0_24], %50 {strides = array<i32>} : memref<1x128xf32, #tpu.memory_space<vmem>>, vector<1x128xf32>,
    %c0_25 = arith.constant 0 : index
    %c0_26 = arith.constant 0 : index
    %52 = vector.load %arg9[%c0_25, %c0_26] : memref<2x128xf32, #tpu.memory_space<vmem>>, vector<1x128xf32>
    tpu.vector_store %arg9[%c0_25, %c0_26], %27 {strides = array<i32>} : memref<2x128xf32, #tpu.memory_space<vmem>>, vector<1x128xf32>,
    %c1 = arith.constant 1 : index
    %c0_27 = arith.constant 0 : index
    %53 = vector.load %arg9[%c1, %c0_27] : memref<2x128xf32, #tpu.memory_space<vmem>>, vector<1x128xf32>
    tpu.vector_store %arg9[%c1, %c0_27], %33 {strides = array<i32>} : memref<2x128xf32, #tpu.memory_space<vmem>>, vector<1x128xf32>,
    %54 = vector.broadcast %37 : vector<1x128xf32> to vector<8x128xf32>
    %55 = arith.mulf %0, %54 : vector<8x128xf32>
    %56 = vector.broadcast %41 : vector<1x128xf32> to vector<8x128xf32>
    %57 = arith.addf %55, %56 : vector<8x128xf32>
    %c0_28 = arith.constant 0 : index
    %c0_29 = arith.constant 0 : index
    %58 = vector.load %arg6[%c0_28, %c0_29] : memref<8x128xf32, #tpu.memory_space<vmem>>, vector<8x128xf32>
    tpu.vector_store %arg6[%c0_28, %c0_29], %57 {strides = array<i32>} : memref<8x128xf32, #tpu.memory_space<vmem>>, vector<8x128xf32>,
    return
  }
  func.func @transform_0(%arg0: i32) -> (i32, i32) {
    %c0_i32 = arith.constant 0 : i32
    %c0_i32_0 = arith.constant 0 : i32
    return %c0_i32, %arg0 : i32, i32
  }
  func.func @transform_1(%arg0: i32) -> (i32, i32) {
    %c0_i32 = arith.constant 0 : i32
    %c0_i32_0 = arith.constant 0 : i32
    return %c0_i32, %arg0 : i32, i32
  }
  func.func @transform_2(%arg0: i32) -> (i32, i32) {
    %c0_i32 = arith.constant 0 : i32
    %c0_i32_0 = arith.constant 0 : i32
    return %c0_i32, %arg0 : i32, i32
  }
  func.func @transform_3(%arg0: i32) -> (i32, i32) {
    %c0_i32 = arith.constant 0 : i32
    %c0_i32_0 = arith.constant 0 : i32
    return %c0_i32, %arg0 : i32, i32
  }
  func.func @transform_4(%arg0: i32) -> (i32, i32) {
    %c0_i32 = arith.constant 0 : i32
    %c0_i32_0 = arith.constant 0 : i32
    return %c0_i32, %arg0 : i32, i32
  }
  func.func @transform_5(%arg0: i32) -> (i32, i32) {
    %c0_i32 = arith.constant 0 : i32
    %c0_i32_0 = arith.constant 0 : i32
    return %c0_i32, %arg0 : i32, i32
  }
  func.func @transform_6(%arg0: i32) -> (i32, i32) {
    %c0_i32 = arith.constant 0 : i32
    %c0_i32_0 = arith.constant 0 : i32
    return %c0_i32, %arg0 : i32, i32
  }
  func.func @transform_7(%arg0: i32) -> (i32, i32) {
    %c0_i32 = arith.constant 0 : i32
    %c0_i32_0 = arith.constant 0 : i32
    return %c0_i32, %arg0 : i32, i32
  }
  func.func @transform_8(%arg0: i32) -> (i32, i32) {
    %c0_i32 = arith.constant 0 : i32
    %c0_i32_0 = arith.constant 0 : i32
    return %c0_i32, %arg0 : i32, i32
  }
}

</mosaic_0001>

<llo_original>
// kernel: tpu_custom_call.1
$region0: #{tpu_custom_call.1}
  #allocation0 [shape = 'u32[]', space=smem, size = 0x4, offset = 0x4, fixed_abs, tag = 'smem constant byte address 0x4 - core index']
  #allocation1 [shape = 'u32[72,128]{1,0:T(1,128)}', space=vmem, size = 0x9000, scoped, tag = 'internal scratch']
  %s0 = inlined_call_operand.hbm [shape: f32[8,128], index: 0, kind: input, shape index: {}]
  %s1 = inlined_call_operand.hbm [shape: f32[1,128], index: 1, kind: input, shape index: {}, may-alias: {1,6}]
  %s2 = inlined_call_operand.hbm [shape: f32[1,128], index: 2, kind: input, shape index: {}, may-alias: {2,7}]
  %s3 = inlined_call_operand.vmem [shape: f32[1,128], index: 3, kind: input, shape index: {}]
  %s4 = inlined_call_operand.vmem [shape: f32[1,128], index: 4, kind: input, shape index: {}]
  %s5 = inlined_call_operand.hbm [shape: f32[8,128], index: 5, kind: output, shape index: {0}]
  %s6 = inlined_call_operand.hbm [shape: f32[1,128], index: 6, kind: output, shape index: {1}, may-alias: {1,6}]
  %s7 = inlined_call_operand.hbm [shape: f32[1,128], index: 7, kind: output, shape index: {2}, may-alias: {2,7}]
  %s8 = inlined_call_operand.hbm [shape: f32[2,128], index: 8, kind: output, shape index: {3}]
  %9 = xla_tuple %s5, %s6, %s7, %s8
  %s10 = sld [smem:[#allocation0]]
  $region66: #{tpu_custom_call.1} parent=0
    _
  %s12 = ssub.s32 1, %s10
  %s13 = scalar_select 0, %s12, %s10
  $region1: #{tpu_custom_call.1} parent=0
    #allocation2 [shape = 'u8[4096]{0}', space=vmem, size = 0x1000, scoped, tag = 'input window, operand 0, single buffered']
    #allocation3 [shape = 's32[1]{0}', space=sflag, size = 0x4, scoped, tag = 'scoped memory for tpu_custom_call.1']
    #allocation4 [shape = 's32[1]{0}', space=sflag, size = 0x4, scoped, tag = 'scoped memory for tpu_custom_call.1']
    #allocation5 [shape = 'u8[512]{0}', space=vmem, size = 0x400, scoped, tag = 'input window, operand 1, single buffered']
    #allocation6 [shape = 's32[1]{0}', space=sflag, size = 0x4, scoped, tag = 'scoped memory for tpu_custom_call.1']
    #allocation7 [shape = 'u8[512]{0}', space=vmem, size = 0x400, scoped, tag = 'input window, operand 2, single buffered']
    #allocation8 [shape = 'u8[4096]{0}', space=vmem, size = 0x1000, scoped, tag = 'output window, operand 0, single buffered']
    #allocation9 [shape = 'u8[512]{0}', space=vmem, size = 0x400, scoped, tag = 'output window, operand 1, single buffered']
    #allocation10 [shape = 's32[1]{0}', space=sflag, size = 0x4, scoped, tag = 'scoped memory for tpu_custom_call.1']
    #allocation11 [shape = 'u8[512]{0}', space=vmem, size = 0x400, scoped, tag = 'output window, operand 2, single buffered']
    #allocation12 [shape = 'u8[1024]{0}', space=vmem, size = 0x400, scoped, tag = 'output window, operand 3, single buffered']
    #allocation13 [shape = 's32[1]{0}', space=sflag, size = 0x4, scoped, tag = 'scoped memory for tpu_custom_call.1']
    %14 = vsyncpa [#allocation3], 0
    %15 = vsyncpa [#allocation6], 0
    %16 = vsyncpa [#allocation4], 0
    %17 = vsyncpa [#allocation10], 0
    %18 = vsyncpa [#allocation13], 0
    // Predicated region
    $region2: #{tpu_custom_call.1} parent=1 // pred_check
      _
    $region3: #{tpu_custom_call.1} parent=1 // pred_check_branch
      %20 = sbr.rel (0) target = $region5
    $region4: #{tpu_custom_call.1} parent=1 // pred_region
      %22 = vsyncadd [#allocation3], 0
      %s24 = sshll.u32 %s0, 4
      %s25 = int_to_ptr.hbm [resolvable:$true] %s24
      %s26 = sshll.u32 [#allocation2], 4
      %s27 = int_to_ptr.vmem [resolvable:$true] %s26
      %29 = dma.hbm_to_vmem [thread:$0]  %s25, 128, %s27, [#allocation3]
    $region5: #{tpu_custom_call.1} parent=1 // pred_fallthru
      _
    // Predicated region
    $region6: #{tpu_custom_call.1} parent=1 // pred_check
      _
    $region7: #{tpu_custom_call.1} parent=1 // pred_check_branch
      %31 = sbr.rel (0) target = $region9
    $region8: #{tpu_custom_call.1} parent=1 // pred_region
      %33 = vsyncadd [#allocation6], 0
      %s35 = sshll.u32 %s1, 4
      %s36 = int_to_ptr.hbm [resolvable:$true] %s35
      %s37 = sshll.u32 [#allocation5], 4
      %s38 = int_to_ptr.vmem [resolvable:$true] %s37
      %40 = dma.hbm_to_vmem [thread:$0]  %s36, 16, %s38, [#allocation6]
    $region9: #{tpu_custom_call.1} parent=1 // pred_fallthru
      _
    // Predicated region
    $region10: #{tpu_custom_call.1} parent=1 // pred_check
      _
    $region11: #{tpu_custom_call.1} parent=1 // pred_check_branch
      %42 = sbr.rel (0) target = $region13
    $region12: #{tpu_custom_call.1} parent=1 // pred_region
      %44 = vsyncadd [#allocation6], 0
      %s46 = sshll.u32 %s2, 4
      %s47 = int_to_ptr.hbm [resolvable:$true] %s46
      %s48 = sshll.u32 [#allocation7], 4
      %s49 = int_to_ptr.vmem [resolvable:$true] %s48
      %51 = dma.hbm_to_vmem [thread:$0]  %s47, 16, %s49, [#allocation6]
    $region13: #{tpu_custom_call.1} parent=1 // pred_fallthru
      _
    // Predicated region
    $region14: #{tpu_custom_call.1} parent=1 // pred_check
      _
    $region15: #{tpu_custom_call.1} parent=1 // pred_check_branch
      %53 = sbr.rel (0) target = $region17
    $region16: #{tpu_custom_call.1} parent=1 // pred_region
      _
    $region17: #{tpu_custom_call.1} parent=1 // pred_fallthru
      _
    // Predicated region
    $region18: #{tpu_custom_call.1} parent=1 // pred_check
      _
    $region19: #{tpu_custom_call.1} parent=1 // pred_check_branch
      %55 = sbr.rel (0) target = $region21
    $region20: #{tpu_custom_call.1} parent=1 // pred_region
      _
    $region21: #{tpu_custom_call.1} parent=1 // pred_fallthru
      _
    // Predicated region
    $region22: #{tpu_custom_call.1} parent=1 // pred_check
      _
    $region23: #{tpu_custom_call.1} parent=1 // pred_check_branch
      %57 = sbr.rel (0) target = $region25
    $region24: #{tpu_custom_call.1} parent=1 // pred_region
      %59 = dma.done [#allocation3], 128
    $region25: #{tpu_custom_call.1} parent=1 // pred_fallthru
      _
    // Predicated region
    $region26: #{tpu_custom_call.1} parent=1 // pred_check
      _
    $region27: #{tpu_custom_call.1} parent=1 // pred_check_branch
      %61 = sbr.rel (0) target = $region29
    $region28: #{tpu_custom_call.1} parent=1 // pred_region
      %63 = dma.done [#allocation6], 16
    $region29: #{tpu_custom_call.1} parent=1 // pred_fallthru
      _
    // Predicated region
    $region30: #{tpu_custom_call.1} parent=1 // pred_check
      _
    $region31: #{tpu_custom_call.1} parent=1 // pred_check_branch
      %65 = sbr.rel (0) target = $region33
    $region32: #{tpu_custom_call.1} parent=1 // pred_region
      %67 = dma.done [#allocation6], 16
    $region33: #{tpu_custom_call.1} parent=1 // pred_fallthru
      _
    %v68 = vld [vmem:[#allocation2] sm:$0xff]
    %v69 = vrot.slane %v68, 4
    %v70 = vadd.f32 %v68, %v69
    %v71 = vrot.slane %v70, 2
    %v72 = vadd.f32 %v70, %v71
    %v73 = vrot.slane %v72, 1
    %v74 = vadd.f32 %v72, %v73
    %v75 = vmul.f32 %v68, %v68
    %v76 = vrot.slane %v75, 4
    %v77 = vadd.f32 %v75, %v76
    %v78 = vrot.slane %v77, 2
    %v79 = vadd.f32 %v77, %v78
    %v80 = vrot.slane %v79, 1
    %v81 = vadd.f32 %v79, %v80
    %v82 = vmul.f32 %v74, 0.125
    %v83 = vmul.f32 %v74, %v82
    %v84 = vsub.f32 %v81, %v83
    %v85 = vmax.f32 %v84, 0.0
    %v86 = vmul.f32 %v85, 0.125
    %v87 = vadd.f32 %v86, 1e-05
    %v88 = vrsqrt.pop %v87
    %v89 = vmul.f32 %v88, %v87
    %v90 = vmul.f32 %v89, %v88
    %v91 = vmul.f32 0.5, %v90
    %v92 = vsub.f32 1.5, %v91
    %v93 = vmul.f32 %v88, %v92
    %vm94 = vweird.f32 %v87
    %vm95 = vweird.f32 %v88
    %vm96 = vmor %vm94, %vm95
    %v97 = vsel %vm96, %v88, %v93
    %v98 = vmul.f32 %v85, 0.14285715
    %v99 = vld [vmem:[#allocation5] sm:$0x1]
    %v100 = vld [vmem:[#allocation7] sm:$0x1]
    %v101 = vrsqrt.pop %v100
    %v102 = vmul.f32 %v101, %v100
    %v103 = vmul.f32 %v102, %v101
    %v104 = vmul.f32 0.5, %v103
    %v105 = vsub.f32 1.5, %v104
    %v106 = vmul.f32 %v101, %v105
    %vm107 = vweird.f32 %v100
    %vm108 = vweird.f32 %v101
    %vm109 = vmor %vm107, %vm108
    %v110 = vsel %vm109, %v101, %v106
    %v111 = vrsqrt.pop %v98
    %v112 = vmul.f32 %v111, %v98
    %v113 = vmul.f32 %v112, %v111
    %v114 = vmul.f32 0.5, %v113
    %v115 = vsub.f32 1.5, %v114
    %v116 = vmul.f32 %v111, %v115
    %v117 = vmul.f32 %v98, %v116
    %vm118 = vcmp.eq.f32.partialorder %v98, inf
    %v119 = vsel %vm118, %v98, %v117
    %vm120 = vcmp.eq.f32.partialorder %v98, 0.0
    %v121 = vand.u32 %v98, 2147483648
    %v122 = vsel %vm120, %v121, %v119
    %v123 = vmul.f32 %v122, %v110
    %v124 = vmax.f32 %v123, 0.33333334
    %v125 = vmin.f32 %v124, 3.0
    %v126 = vsub.f32 %v82, %v99
    %v127 = vmul.f32 %v126, %v110
    %v128 = vmax.f32 %v127, -5.0
    %v129 = vmin.f32 %v128, 5.0
    %v130 = vld [vmem:[%s3] sm:$0x1]
    %v131 = vld [vmem:[%s4] sm:$0x1]
    %v132 = vmul.f32 %v97, %v125
    %v133 = vmul.f32 %v130, %v132
    %v134 = vmul.f32 %v82, %v132
    %v135 = vsub.f32 %v129, %v134
    %v136 = vmul.f32 %v130, %v135
    %v137 = vadd.f32 %v136, %v131
    %v138 = vmul.f32 %v126, 0.1
    %v139 = vadd.f32 %v99, %v138
    %140 = vst [vmem:[#allocation9] sm:$0x1] %v139
    %v141 = vsub.f32 %v98, %v100
    %v142 = vmul.f32 %v141, 0.1
    %v143 = vadd.f32 %v100, %v142
    %144 = vst [vmem:[#allocation11] sm:$0x1] %v143
    %145 = vst [vmem:[#allocation12] sm:$0x1] %v125
    %146 = vst [vmem:[#allocation12 + $0x1] sm:$0x1] %v129
    %v148 = vperm.slane %v133, 0
    %v150 = vmul.f32 %v68, %v148
    %v152 = vperm.slane %v137, 0
    %v154 = vadd.f32 %v150, %v152
    %155 = vst [vmem:[#allocation8] sm:$0xff] %v154
    // Predicated region
    $region34: #{tpu_custom_call.1} parent=1 // pred_check
      _
    $region35: #{tpu_custom_call.1} parent=1 // pred_check_branch
      %157 = sbr.rel (0) target = $region37
    $region36: #{tpu_custom_call.1} parent=1 // pred_region
      %159 = vsyncadd [#allocation4], 0
      %s161 = sshll.u32 [#allocation8], 4
      %s162 = int_to_ptr.vmem [resolvable:$true] %s161
      %s163 = sshll.u32 %s5, 4
      %s164 = int_to_ptr.hbm [resolvable:$true] %s163
      %166 = dma.vmem_to_hbm [thread:$0]  %s162, 128, %s164, [#allocation4]
    $region37: #{tpu_custom_call.1} parent=1 // pred_fallthru
      _
    // Predicated region
    $region38: #{tpu_custom_call.1} parent=1 // pred_check
      _
    $region39: #{tpu_custom_call.1} parent=1 // pred_check_branch
      %168 = sbr.rel (0) target = $region41
    $region40: #{tpu_custom_call.1} parent=1 // pred_region
      %170 = vsyncadd [#allocation10], 0
      %s172 = sshll.u32 [#allocation9], 4
      %s173 = int_to_ptr.vmem [resolvable:$true] %s172
      %s174 = sshll.u32 %s6, 4
      %s175 = int_to_ptr.hbm [resolvable:$true] %s174
      %177 = dma.vmem_to_hbm [thread:$0]  %s173, 16, %s175, [#allocation10]
    $region41: #{tpu_custom_call.1} parent=1 // pred_fallthru
      _
    // Predicated region
    $region42: #{tpu_custom_call.1} parent=1 // pred_check
      _
    $region43: #{tpu_custom_call.1} parent=1 // pred_check_branch
      %179 = sbr.rel (0) target = $region45
    $region44: #{tpu_custom_call.1} parent=1 // pred_region
      %181 = vsyncadd [#allocation10], 0
      %s183 = sshll.u32 [#allocation11], 4
      %s184 = int_to_ptr.vmem [resolvable:$true] %s183
      %s185 = sshll.u32 %s7, 4
      %s186 = int_to_ptr.hbm [resolvable:$true] %s185
      %188 = dma.vmem_to_hbm [thread:$0]  %s184, 16, %s186, [#allocation10]
    $region45: #{tpu_custom_call.1} parent=1 // pred_fallthru
      _
    // Predicated region
    $region46: #{tpu_custom_call.1} parent=1 // pred_check
      _
    $region47: #{tpu_custom_call.1} parent=1 // pred_check_branch
      %190 = sbr.rel (0) target = $region49
    $region48: #{tpu_custom_call.1} parent=1 // pred_region
      %192 = vsyncadd [#allocation13], 0
      %s194 = sshll.u32 [#allocation12], 4
      %s195 = int_to_ptr.vmem [resolvable:$true] %s194
      %s196 = sshll.u32 %s8, 4
      %s197 = int_to_ptr.hbm [resolvable:$true] %s196
      %199 = dma.vmem_to_hbm [thread:$0]  %s195, 32, %s197, [#allocation13]
    $region49: #{tpu_custom_call.1} parent=1 // pred_fallthru
      _
    // Predicated region
    $region50: #{tpu_custom_call.1} parent=1 // pred_check
      _
    $region51: #{tpu_custom_call.1} parent=1 // pred_check_branch
      %201 = sbr.rel (0) target = $region53
    $region52: #{tpu_custom_call.1} parent=1 // pred_region
      %203 = dma.done [#allocation4], 128
    $region53: #{tpu_custom_call.1} parent=1 // pred_fallthru
      _
    // Predicated region
    $region54: #{tpu_custom_call.1} parent=1 // pred_check
      _
    $region55: #{tpu_custom_call.1} parent=1 // pred_check_branch
      %205 = sbr.rel (0) target = $region57
    $region56: #{tpu_custom_call.1} parent=1 // pred_region
      %207 = dma.done [#allocation10], 16
    $region57: #{tpu_custom_call.1} parent=1 // pred_fallthru
      _
    // Predicated region
    $region58: #{tpu_custom_call.1} parent=1 // pred_check
      _
    $region59: #{tpu_custom_call.1} parent=1 // pred_check_branch
      %209 = sbr.rel (0) target = $region61
    $region60: #{tpu_custom_call.1} parent=1 // pred_region
      %211 = dma.done [#allocation10], 16
    $region61: #{tpu_custom_call.1} parent=1 // pred_fallthru
      _
    // Predicated region
    $region62: #{tpu_custom_call.1} parent=1 // pred_check
      _
    $region63: #{tpu_custom_call.1} parent=1 // pred_check_branch
      %213 = sbr.rel (0) target = $region65
    $region64: #{tpu_custom_call.1} parent=1 // pred_region
      %215 = dma.done [#allocation13], 32
    $region65: #{tpu_custom_call.1} parent=1 // pred_fallthru
      _
    %216 = vsyncpa [#allocation3], 1
    %217 = vsyncpa [#allocation6], 1
    %218 = vsyncpa [#allocation4], 1
    %219 = vsyncpa [#allocation10], 1
    %220 = vsyncpa [#allocation13], 1

</llo_original>
